<compile_context>
chip_gen: v7x
topology: tpu7x:2x2x1
jax: 0.10.0
libtpu: 0.0.40
codegen_flags: <defaults>
</compile_context>

<pallas_src>
import jax
import jax.numpy as jnp
from jax.experimental import pallas as pl
from jax.experimental.pallas import tpu as pltpu

INPUT_DIM = 128          # latent_projector input (after optional concat)
PROJ_HID = 128
LATENT_DIM = 64
CONTRASTIVE_HID = 64
CONTRASTIVE_DIM = 32
CLASSIFIER_HID = 32
N_EMOTIONS = 5           # len(EmotionCategory)
LANE = 128               # TPU lane width; all feature dims padded to this


# ----------------------------------------------------------------------------
# Fused Pallas kernel: whole forward for one row-tile
# ----------------------------------------------------------------------------
def _fused_kernel(x_ref,
                  w1_ref, b1_ref, w2_ref, b2_ref,
                  wc1_ref, bc1_ref, wc2_ref, bc2_ref,
                  we1_ref, be1_ref, we2_ref, be2_ref,
                  latent_ref, contrast_ref, logits_ref, probs_ref):
    x = x_ref[...]                                                      # (TM, 128)

    # latent_projector: Linear -> ReLU -> Dropout(eval: identity) -> Linear
    h = jnp.dot(x, w1_ref[...], preferred_element_type=jnp.float32) + b1_ref[...]
    h = jnp.maximum(h, 0.0)
    latent = jnp.dot(h, w2_ref[...], preferred_element_type=jnp.float32) + b2_ref[...]
    latent_ref[...] = latent                      # cols >= LATENT_DIM are exactly 0

    # contrastive_head: Linear -> ReLU -> Linear
    hc = jnp.dot(latent, wc1_ref[...], preferred_element_type=jnp.float32) + bc1_ref[...]
    hc = jnp.maximum(hc, 0.0)
    contrast = jnp.dot(hc, wc2_ref[...], preferred_element_type=jnp.float32) + bc2_ref[...]
    contrast_ref[...] = contrast

    # emotion_classifier: Linear -> ReLU -> Linear
    he = jnp.dot(latent, we1_ref[...], preferred_element_type=jnp.float32) + be1_ref[...]
    he = jnp.maximum(he, 0.0)
    logits = jnp.dot(he, we2_ref[...], preferred_element_type=jnp.float32) + be2_ref[...]
    logits_ref[...] = logits

    # softmax over the 5 real emotion columns only (padded lanes masked out)
    col = jax.lax.broadcasted_iota(jnp.int32, logits.shape, 1)
    masked = jnp.where(col < N_EMOTIONS, logits, -jnp.inf)
    m = jnp.max(masked, axis=-1, keepdims=True)
    e = jnp.exp(masked - m)
    denom = jnp.sum(e, axis=-1, keepdims=True)
    probs_ref[...] = e * pl.reciprocal(denom, approx=True)   # divide on the EUP slot


# ----------------------------------------------------------------------------
# Wrapper: padding, tiling, pallas_call
# ----------------------------------------------------------------------------
def _pad_w(w):
    r, c = w.shape
    return jnp.pad(w, ((0, LANE - r), (0, LANE - c)))       # zero-pad to (128, 128)


def _pad_b(b):
    return jnp.pad(b, (0, LANE - b.shape[0]))[None, :]      # (1, 128)


def emotional_latent_learner_forward(params, multimodal_features,
                                     physiological_state=None):
    if physiological_state is not None:
        features = jnp.concatenate(
            [multimodal_features, physiological_state], axis=-1)
    else:
        features = multimodal_features
    features = features.astype(jnp.float32)
    assert features.shape[-1] == INPUT_DIM, features.shape

    n = features.shape[0]
    n8 = ((n + 7) // 8) * 8                 # sublane-aligned row count
    tm = min(n8, 128)                       # up to 128 rows per grid step
    npad = ((n8 + tm - 1) // tm) * tm
    grid = npad // tm

    x = jnp.pad(features, ((0, npad - n), (0, 0)))           # (npad, 128)

    p = params
    args = (x,
            _pad_w(p["w1"]), _pad_b(p["b1"]), _pad_w(p["w2"]), _pad_b(p["b2"]),
            _pad_w(p["wc1"]), _pad_b(p["bc1"]), _pad_w(p["wc2"]), _pad_b(p["bc2"]),
            _pad_w(p["we1"]), _pad_b(p["be1"]), _pad_w(p["we2"]), _pad_b(p["be2"]))

    row_spec = pl.BlockSpec((tm, LANE), lambda i: (i, 0))
    w_spec = pl.BlockSpec((LANE, LANE), lambda i: (0, 0))
    b_spec = pl.BlockSpec((1, LANE), lambda i: (0, 0))

    out_shapes = tuple(jax.ShapeDtypeStruct((npad, LANE), jnp.float32)
                       for _ in range(4))
    out_specs = tuple(pl.BlockSpec((tm, LANE), lambda i: (i, 0))
                      for _ in range(4))

    latent_p, contrast_p, logits_p, probs_p = pl.pallas_call(
        _fused_kernel,
        out_shape=out_shapes,
        grid=(grid,),
        in_specs=[row_spec] + [w_spec, b_spec] * 6,
        out_specs=out_specs,
        compiler_params=pltpu.CompilerParams(
            dimension_semantics=("parallel",)),   # batch rows shard across TCs (v7x)
    )(*args)

    return {
        "latent": latent_p[:n, :LATENT_DIM],
        "contrastive": contrast_p[:n, :CONTRASTIVE_DIM],
        "emotion_logits": logits_p[:n, :N_EMOTIONS],
        "emotion_probs": probs_p[:n, :N_EMOTIONS],
    }


# ----------------------------------------------------------------------------
# Parameters (deterministic synthetic init, PyTorch-Linear-like)
# ----------------------------------------------------------------------------
def init_params(key):
    keys = jax.random.split(key, 6)

    def dense(k, fan_in, fan_out):
        bound = 1.0 / jnp.sqrt(jnp.float32(fan_in))
        w = jax.random.uniform(k, (fan_in, fan_out), jnp.float32, -bound, bound)
        b = jnp.zeros((fan_out,), jnp.float32)
        return w, b

    w1, b1 = dense(keys[0], INPUT_DIM, PROJ_HID)
    w2, b2 = dense(keys[1], PROJ_HID, LATENT_DIM)
    wc1, bc1 = dense(keys[2], LATENT_DIM, CONTRASTIVE_HID)
    wc2, bc2 = dense(keys[3], CONTRASTIVE_HID, CONTRASTIVE_DIM)
    we1, be1 = dense(keys[4], LATENT_DIM, CLASSIFIER_HID)
    we2, be2 = dense(keys[5], CLASSIFIER_HID, N_EMOTIONS)
    return dict(w1=w1, b1=b1, w2=w2, b2=b2,
                wc1=wc1, bc1=bc1, wc2=wc2, bc2=bc2,
                we1=we1, be1=be1, we2=we2, be2=be2)


# ----------------------------------------------------------------------------
if __name__ == "__main__":
    key = jax.random.PRNGKey(0)
    pkey, mkey, phkey = jax.random.split(key, 3)
    params = init_params(pkey)

    batch = 8
    # multimodal features (8, 96) + physiological state (8, 32) -> concat to 128
    multimodal = jax.random.normal(mkey, (batch, 96), jnp.float32)
    phys = jax.random.normal(phkey, (batch, 32), jnp.float32)

    out = emotional_latent_learner_forward(params, multimodal, phys)
    out = jax.block_until_ready(out)

    assert out["latent"].shape == (batch, LATENT_DIM), out["latent"].shape
    assert out["contrastive"].shape == (batch, CONTRASTIVE_DIM)
    assert out["emotion_logits"].shape == (batch, N_EMOTIONS)
    assert out["emotion_probs"].shape == (batch, N_EMOTIONS)
    for v in out.values():
        assert bool(jnp.all(jnp.isfinite(v)))
    assert bool(jnp.all(out["emotion_probs"] >= 0.0))
    assert bool(jnp.all(jnp.abs(jnp.sum(out["emotion_probs"], axis=-1) - 1.0) < 1e-2))

    # also exercise the physiological_state=None path (full 128-dim features)
    feats_full = jnp.concatenate([multimodal, phys], axis=-1)
    out2 = jax.block_until_ready(
        emotional_latent_learner_forward(params, feats_full))
    assert out2["emotion_probs"].shape == (batch, N_EMOTIONS)

    print("KERNEL_OK")
</pallas_src>

<mosaic_0001>
module attributes {stable_mosaic.version = 11 : i64} {
  func.func @_fused_kernel(%arg0: i32, %arg1: memref<8x128xf32, #tpu.memory_space<vmem>>, %arg2: memref<128x128xf32, #tpu.memory_space<vmem>>, %arg3: memref<1x128xf32, #tpu.memory_space<vmem>>, %arg4: memref<128x128xf32, #tpu.memory_space<vmem>>, %arg5: memref<1x128xf32, #tpu.memory_space<vmem>>, %arg6: memref<128x128xf32, #tpu.memory_space<vmem>>, %arg7: memref<1x128xf32, #tpu.memory_space<vmem>>, %arg8: memref<128x128xf32, #tpu.memory_space<vmem>>, %arg9: memref<1x128xf32, #tpu.memory_space<vmem>>, %arg10: memref<128x128xf32, #tpu.memory_space<vmem>>, %arg11: memref<1x128xf32, #tpu.memory_space<vmem>>, %arg12: memref<128x128xf32, #tpu.memory_space<vmem>>, %arg13: memref<1x128xf32, #tpu.memory_space<vmem>>, %arg14: memref<8x128xf32, #tpu.memory_space<vmem>>, %arg15: memref<8x128xf32, #tpu.memory_space<vmem>>, %arg16: memref<8x128xf32, #tpu.memory_space<vmem>>, %arg17: memref<8x128xf32, #tpu.memory_space<vmem>>) attributes {dimension_semantics = [#tpu.dimension_semantics<parallel>], iteration_bounds = array<i64: 1>, scalar_prefetch = 0 : i64, scratch_operands = 0 : i64, tpu.core_type = #tpu.core_type<tc>, window_params = [{transform_indices = @transform_0, window_bounds = array<i64: 8, 128>}, {pipeline_mode = #tpu.pipeline_mode<synchronous>, transform_indices = @transform_1, window_bounds = array<i64: 128, 128>}, {pipeline_mode = #tpu.pipeline_mode<synchronous>, transform_indices = @transform_2, window_bounds = array<i64: 1, 128>}, {pipeline_mode = #tpu.pipeline_mode<synchronous>, transform_indices = @transform_3, window_bounds = array<i64: 128, 128>}, {pipeline_mode = #tpu.pipeline_mode<synchronous>, transform_indices = @transform_4, window_bounds = array<i64: 1, 128>}, {pipeline_mode = #tpu.pipeline_mode<synchronous>, transform_indices = @transform_5, window_bounds = array<i64: 128, 128>}, {pipeline_mode = #tpu.pipeline_mode<synchronous>, transform_indices = @transform_6, window_bounds = array<i64: 1, 128>}, {pipeline_mode = #tpu.pipeline_mode<synchronous>, transform_indices = @transform_7, window_bounds = array<i64: 128, 128>}, {pipeline_mode = #tpu.pipeline_mode<synchronous>, transform_indices = @transform_8, window_bounds = array<i64: 1, 128>}, {pipeline_mode = #tpu.pipeline_mode<synchronous>, transform_indices = @transform_9, window_bounds = array<i64: 128, 128>}, {pipeline_mode = #tpu.pipeline_mode<synchronous>, transform_indices = @transform_10, window_bounds = array<i64: 1, 128>}, {pipeline_mode = #tpu.pipeline_mode<synchronous>, transform_indices = @transform_11, window_bounds = array<i64: 128, 128>}, {pipeline_mode = #tpu.pipeline_mode<synchronous>, transform_indices = @transform_12, window_bounds = array<i64: 1, 128>}, {transform_indices = @transform_13, window_bounds = array<i64: 8, 128>}, {transform_indices = @transform_14, window_bounds = array<i64: 8, 128>}, {transform_indices = @transform_15, window_bounds = array<i64: 8, 128>}, {transform_indices = @transform_16, window_bounds = array<i64: 8, 128>}]} {
    %c0 = arith.constant 0 : index
    %c0_0 = arith.constant 0 : index
    %0 = vector.load %arg1[%c0, %c0_0] : memref<8x128xf32, #tpu.memory_space<vmem>>, vector<8x128xf32>
    %c0_1 = arith.constant 0 : index
    %c0_2 = arith.constant 0 : index
    %1 = vector.load %arg2[%c0_1, %c0_2] : memref<128x128xf32, #tpu.memory_space<vmem>>, vector<128x128xf32>
    %cst = arith.constant dense<0.000000e+00> : vector<8x128xf32>
    %2 = tpu.matmul %0, %1, %cst {dimension_numbers = #tpu.dot_dimension_numbers<[1], [0], [0], [1], [0, 0, 1, 1], [], []>} : vector<8x128xf32>, vector<128x128xf32>, vector<8x128xf32> -> vector<8x128xf32>
    %c0_3 = arith.constant 0 : index
    %c0_4 = arith.constant 0 : index
    %3 = vector.load %arg3[%c0_3, %c0_4] : memref<1x128xf32, #tpu.memory_space<vmem>>, vector<1x128xf32>
    %4 = vector.broadcast %3 : vector<1x128xf32> to vector<8x128xf32>
    %5 = arith.addf %2, %4 : vector<8x128xf32>
    %cst_5 = arith.constant 0.000000e+00 : f32
    %6 = vector.broadcast %cst_5 : f32 to vector<8x128xf32>
    %7 = arith.maximumf %5, %6 : vector<8x128xf32>
    %c0_6 = arith.constant 0 : index
    %c0_7 = arith.constant 0 : index
    %8 = vector.load %arg4[%c0_6, %c0_7] : memref<128x128xf32, #tpu.memory_space<vmem>>, vector<128x128xf32>
    %cst_8 = arith.constant dense<0.000000e+00> : vector<8x128xf32>
    %9 = tpu.matmul %7, %8, %cst_8 {dimension_numbers = #tpu.dot_dimension_numbers<[1], [0], [0], [1], [0, 0, 1, 1], [], []>} : vector<8x128xf32>, vector<128x128xf32>, vector<8x128xf32> -> vector<8x128xf32>
    %c0_9 = arith.constant 0 : index
    %c0_10 = arith.constant 0 : index
    %10 = vector.load %arg5[%c0_9, %c0_10] : memref<1x128xf32, #tpu.memory_space<vmem>>, vector<1x128xf32>
    %11 = vector.broadcast %10 : vector<1x128xf32> to vector<8x128xf32>
    %12 = arith.addf %9, %11 : vector<8x128xf32>
    %c0_11 = arith.constant 0 : index
    %c0_12 = arith.constant 0 : index
    %13 = vector.load %arg14[%c0_11, %c0_12] : memref<8x128xf32, #tpu.memory_space<vmem>>, vector<8x128xf32>
    tpu.vector_store %arg14[%c0_11, %c0_12], %12 {strides = array<i32>} : memref<8x128xf32, #tpu.memory_space<vmem>>, vector<8x128xf32>,
    %c0_13 = arith.constant 0 : index
    %c0_14 = arith.constant 0 : index
    %14 = vector.load %arg6[%c0_13, %c0_14] : memref<128x128xf32, #tpu.memory_space<vmem>>, vector<128x128xf32>
    %cst_15 = arith.constant dense<0.000000e+00> : vector<8x128xf32>
    %15 = tpu.matmul %12, %14, %cst_15 {dimension_numbers = #tpu.dot_dimension_numbers<[1], [0], [0], [1], [0, 0, 1, 1], [], []>} : vector<8x128xf32>, vector<128x128xf32>, vector<8x128xf32> -> vector<8x128xf32>
    %c0_16 = arith.constant 0 : index
    %c0_17 = arith.constant 0 : index
    %16 = vector.load %arg7[%c0_16, %c0_17] : memref<1x128xf32, #tpu.memory_space<vmem>>, vector<1x128xf32>
    %17 = vector.broadcast %16 : vector<1x128xf32> to vector<8x128xf32>
    %18 = arith.addf %15, %17 : vector<8x128xf32>
    %cst_18 = arith.constant 0.000000e+00 : f32
    %19 = vector.broadcast %cst_18 : f32 to vector<8x128xf32>
    %20 = arith.maximumf %18, %19 : vector<8x128xf32>
    %c0_19 = arith.constant 0 : index
    %c0_20 = arith.constant 0 : index
    %21 = vector.load %arg8[%c0_19, %c0_20] : memref<128x128xf32, #tpu.memory_space<vmem>>, vector<128x128xf32>
    %cst_21 = arith.constant dense<0.000000e+00> : vector<8x128xf32>
    %22 = tpu.matmul %20, %21, %cst_21 {dimension_numbers = #tpu.dot_dimension_numbers<[1], [0], [0], [1], [0, 0, 1, 1], [], []>} : vector<8x128xf32>, vector<128x128xf32>, vector<8x128xf32> -> vector<8x128xf32>
    %c0_22 = arith.constant 0 : index
    %c0_23 = arith.constant 0 : index
    %23 = vector.load %arg9[%c0_22, %c0_23] : memref<1x128xf32, #tpu.memory_space<vmem>>, vector<1x128xf32>
    %24 = vector.broadcast %23 : vector<1x128xf32> to vector<8x128xf32>
    %25 = arith.addf %22, %24 : vector<8x128xf32>
    %c0_24 = arith.constant 0 : index
    %c0_25 = arith.constant 0 : index
    %26 = vector.load %arg15[%c0_24, %c0_25] : memref<8x128xf32, #tpu.memory_space<vmem>>, vector<8x128xf32>
    tpu.vector_store %arg15[%c0_24, %c0_25], %25 {strides = array<i32>} : memref<8x128xf32, #tpu.memory_space<vmem>>, vector<8x128xf32>,
    %c0_26 = arith.constant 0 : index
    %c0_27 = arith.constant 0 : index
    %27 = vector.load %arg10[%c0_26, %c0_27] : memref<128x128xf32, #tpu.memory_space<vmem>>, vector<128x128xf32>
    %cst_28 = arith.constant dense<0.000000e+00> : vector<8x128xf32>
    %28 = tpu.matmul %12, %27, %cst_28 {dimension_numbers = #tpu.dot_dimension_numbers<[1], [0], [0], [1], [0, 0, 1, 1], [], []>} : vector<8x128xf32>, vector<128x128xf32>, vector<8x128xf32> -> vector<8x128xf32>
    %c0_29 = arith.constant 0 : index
    %c0_30 = arith.constant 0 : index
    %29 = vector.load %arg11[%c0_29, %c0_30] : memref<1x128xf32, #tpu.memory_space<vmem>>, vector<1x128xf32>
    %30 = vector.broadcast %29 : vector<1x128xf32> to vector<8x128xf32>
    %31 = arith.addf %28, %30 : vector<8x128xf32>
    %cst_31 = arith.constant 0.000000e+00 : f32
    %32 = vector.broadcast %cst_31 : f32 to vector<8x128xf32>
    %33 = arith.maximumf %31, %32 : vector<8x128xf32>
    %c0_32 = arith.constant 0 : index
    %c0_33 = arith.constant 0 : index
    %34 = vector.load %arg12[%c0_32, %c0_33] : memref<128x128xf32, #tpu.memory_space<vmem>>, vector<128x128xf32>
    %cst_34 = arith.constant dense<0.000000e+00> : vector<8x128xf32>
    %35 = tpu.matmul %33, %34, %cst_34 {dimension_numbers = #tpu.dot_dimension_numbers<[1], [0], [0], [1], [0, 0, 1, 1], [], []>} : vector<8x128xf32>, vector<128x128xf32>, vector<8x128xf32> -> vector<8x128xf32>
    %c0_35 = arith.constant 0 : index
    %c0_36 = arith.constant 0 : index
    %36 = vector.load %arg13[%c0_35, %c0_36] : memref<1x128xf32, #tpu.memory_space<vmem>>, vector<1x128xf32>
    %37 = vector.broadcast %36 : vector<1x128xf32> to vector<8x128xf32>
    %38 = arith.addf %35, %37 : vector<8x128xf32>
    %c0_37 = arith.constant 0 : index
    %c0_38 = arith.constant 0 : index
    %39 = vector.load %arg16[%c0_37, %c0_38] : memref<8x128xf32, #tpu.memory_space<vmem>>, vector<8x128xf32>
    tpu.vector_store %arg16[%c0_37, %c0_38], %38 {strides = array<i32>} : memref<8x128xf32, #tpu.memory_space<vmem>>, vector<8x128xf32>,
    %40 = tpu.iota {dimensions = array<i32: 1>} : vector<8x128xi32>
    %c5_i32 = arith.constant 5 : i32
    %41 = vector.broadcast %c5_i32 : i32 to vector<8x128xi32>
    %42 = arith.cmpi slt, %40, %41 : vector<8x128xi32>
    %cst_39 = arith.constant 0xFF800000 : f32
    %43 = vector.broadcast %cst_39 : f32 to vector<8x128xf32>
    %44 = arith.select %42, %38, %43 : vector<8x128xi1>, vector<8x128xf32>
    %cst_40 = arith.constant dense<0xFF800000> : vector<8xf32>
    %45 = vector.multi_reduction <maximumf>, %44, %cst_40 [1] : vector<8x128xf32> to vector<8xf32>
    %46 = vector.shape_cast %45 : vector<8xf32> to vector<8x1xf32>
    %47 = vector.broadcast %46 : vector<8x1xf32> to vector<8x128xf32>
    %48 = arith.subf %44, %47 : vector<8x128xf32>
    %49 = math.exp %48 : vector<8x128xf32>
    %cst_41 = arith.constant dense<0.000000e+00> : vector<8xf32>
    %50 = vector.multi_reduction <add>, %49, %cst_41 [1] : vector<8x128xf32> to vector<8xf32>
    %51 = vector.shape_cast %50 : vector<8xf32> to vector<8x1xf32>
    %52 = tpu.reciprocal %51 {approx = true} : vector<8x1xf32> -> vector<8x1xf32>
    %53 = vector.broadcast %52 : vector<8x1xf32> to vector<8x128xf32>
    %54 = arith.mulf %49, %53 : vector<8x128xf32>
    %c0_42 = arith.constant 0 : index
    %c0_43 = arith.constant 0 : index
    %55 = vector.load %arg17[%c0_42, %c0_43] : memref<8x128xf32, #tpu.memory_space<vmem>>, vector<8x128xf32>
    tpu.vector_store %arg17[%c0_42, %c0_43], %54 {strides = array<i32>} : memref<8x128xf32, #tpu.memory_space<vmem>>, vector<8x128xf32>,
    return
  }
  func.func @transform_0(%arg0: i32) -> (i32, i32) {
    %c0_i32 = arith.constant 0 : i32
    %c0_i32_0 = arith.constant 0 : i32
    return %arg0, %c0_i32 : i32, i32
  }
  func.func @transform_1(%arg0: i32) -> (i32, i32) {
    %c0_i32 = arith.constant 0 : i32
    %c0_i32_0 = arith.constant 0 : i32
    %c0_i32_1 = arith.constant 0 : i32
    return %c0_i32, %c0_i32_0 : i32, i32
  }
  func.func @transform_2(%arg0: i32) -> (i32, i32) {
    %c0_i32 = arith.constant 0 : i32
    %c0_i32_0 = arith.constant 0 : i32
    %c0_i32_1 = arith.constant 0 : i32
    return %c0_i32, %c0_i32_0 : i32, i32
  }
  func.func @transform_3(%arg0: i32) -> (i32, i32) {
    %c0_i32 = arith.constant 0 : i32
    %c0_i32_0 = arith.constant 0 : i32
    %c0_i32_1 = arith.constant 0 : i32
    return %c0_i32, %c0_i32_0 : i32, i32
  }
  func.func @transform_4(%arg0: i32) -> (i32, i32) {
    %c0_i32 = arith.constant 0 : i32
    %c0_i32_0 = arith.constant 0 : i32
    %c0_i32_1 = arith.constant 0 : i32
    return %c0_i32, %c0_i32_0 : i32, i32
  }
  func.func @transform_5(%arg0: i32) -> (i32, i32) {
    %c0_i32 = arith.constant 0 : i32
    %c0_i32_0 = arith.constant 0 : i32
    %c0_i32_1 = arith.constant 0 : i32
    return %c0_i32, %c0_i32_0 : i32, i32
  }
  func.func @transform_6(%arg0: i32) -> (i32, i32) {
    %c0_i32 = arith.constant 0 : i32
    %c0_i32_0 = arith.constant 0 : i32
    %c0_i32_1 = arith.constant 0 : i32
    return %c0_i32, %c0_i32_0 : i32, i32
  }
  func.func @transform_7(%arg0: i32) -> (i32, i32) {
    %c0_i32 = arith.constant 0 : i32
    %c0_i32_0 = arith.constant 0 : i32
    %c0_i32_1 = arith.constant 0 : i32
    return %c0_i32, %c0_i32_0 : i32, i32
  }
  func.func @transform_8(%arg0: i32) -> (i32, i32) {
    %c0_i32 = arith.constant 0 : i32
    %c0_i32_0 = arith.constant 0 : i32
    %c0_i32_1 = arith.constant 0 : i32
    return %c0_i32, %c0_i32_0 : i32, i32
  }
  func.func @transform_9(%arg0: i32) -> (i32, i32) {
    %c0_i32 = arith.constant 0 : i32
    %c0_i32_0 = arith.constant 0 : i32
    %c0_i32_1 = arith.constant 0 : i32
    return %c0_i32, %c0_i32_0 : i32, i32
  }
  func.func @transform_10(%arg0: i32) -> (i32, i32) {
    %c0_i32 = arith.constant 0 : i32
    %c0_i32_0 = arith.constant 0 : i32
    %c0_i32_1 = arith.constant 0 : i32
    return %c0_i32, %c0_i32_0 : i32, i32
  }
  func.func @transform_11(%arg0: i32) -> (i32, i32) {
    %c0_i32 = arith.constant 0 : i32
    %c0_i32_0 = arith.constant 0 : i32
    %c0_i32_1 = arith.constant 0 : i32
    return %c0_i32, %c0_i32_0 : i32, i32
  }
  func.func @transform_12(%arg0: i32) -> (i32, i32) {
    %c0_i32 = arith.constant 0 : i32
    %c0_i32_0 = arith.constant 0 : i32
    %c0_i32_1 = arith.constant 0 : i32
    return %c0_i32, %c0_i32_0 : i32, i32
  }
  func.func @transform_13(%arg0: i32) -> (i32, i32) {
    %c0_i32 = arith.constant 0 : i32
    %c0_i32_0 = arith.constant 0 : i32
    return %arg0, %c0_i32 : i32, i32
  }
  func.func @transform_14(%arg0: i32) -> (i32, i32) {
    %c0_i32 = arith.constant 0 : i32
    %c0_i32_0 = arith.constant 0 : i32
    return %arg0, %c0_i32 : i32, i32
  }
  func.func @transform_15(%arg0: i32) -> (i32, i32) {
    %c0_i32 = arith.constant 0 : i32
    %c0_i32_0 = arith.constant 0 : i32
    return %arg0, %c0_i32 : i32, i32
  }
  func.func @transform_16(%arg0: i32) -> (i32, i32) {
    %c0_i32 = arith.constant 0 : i32
    %c0_i32_0 = arith.constant 0 : i32
    return %arg0, %c0_i32 : i32, i32
  }
}

</mosaic_0001>

<llo_original>
// kernel: tpu_custom_call.1
$region0: #{tpu_custom_call.1}
  #allocation0 [shape = 'u32[]', space=smem, size = 0x4, offset = 0x4, fixed_abs, tag = 'smem constant byte address 0x4 - core index']
  #allocation1 [shape = 'u32[144,128]{1,0:T(1,128)}', space=vmem, size = 0x12000, scoped, tag = 'internal scratch']
  %s0 = inlined_call_operand.hbm [shape: f32[8,128], index: 0, kind: input, shape index: {}]
  %s1 = inlined_call_operand.hbm [shape: f32[128,128], index: 1, kind: input, shape index: {}]
  %s2 = inlined_call_operand.vmem [shape: f32[1,128], index: 2, kind: input, shape index: {}]
  %s3 = inlined_call_operand.hbm [shape: f32[128,128], index: 3, kind: input, shape index: {}]
  %s4 = inlined_call_operand.vmem [shape: f32[1,128], index: 4, kind: input, shape index: {}]
  %s5 = inlined_call_operand.hbm [shape: f32[128,128], index: 5, kind: input, shape index: {}]
  %s6 = inlined_call_operand.vmem [shape: f32[1,128], index: 6, kind: input, shape index: {}]
  %s7 = inlined_call_operand.hbm [shape: f32[128,128], index: 7, kind: input, shape index: {}]
  %s8 = inlined_call_operand.vmem [shape: f32[1,128], index: 8, kind: input, shape index: {}]
  %s9 = inlined_call_operand.hbm [shape: f32[128,128], index: 9, kind: input, shape index: {}]
  %s10 = inlined_call_operand.vmem [shape: f32[1,128], index: 10, kind: input, shape index: {}]
  %s11 = inlined_call_operand.hbm [shape: f32[128,128], index: 11, kind: input, shape index: {}]
  %s12 = inlined_call_operand.vmem [shape: f32[1,128], index: 12, kind: input, shape index: {}]
  %s13 = inlined_call_operand.hbm [shape: f32[8,128], index: 13, kind: output, shape index: {0}]
  %s14 = inlined_call_operand.hbm [shape: f32[8,128], index: 14, kind: output, shape index: {1}]
  %s15 = inlined_call_operand.hbm [shape: f32[8,128], index: 15, kind: output, shape index: {2}]
  %s16 = inlined_call_operand.hbm [shape: f32[8,128], index: 16, kind: output, shape index: {3}]
  %17 = xla_tuple %s13, %s14, %s15, %s16
  %s18 = sld [smem:[#allocation0]]
  $region114: #{tpu_custom_call.1} parent=0
    _
  %s20 = ssub.s32 1, %s18
  %s21 = scalar_select 0, %s20, %s18
  $region1: #{tpu_custom_call.1} parent=0
    #allocation2 [shape = 'u8[4096]{0}', space=vmem, size = 0x1000, scoped, tag = 'input window, operand 0, single buffered']
    #allocation3 [shape = 's32[1]{0}', space=sflag, size = 0x4, scoped, tag = 'scoped memory for tpu_custom_call.1']
    #allocation4 [shape = 's32[1]{0}', space=sflag, size = 0x4, scoped, tag = 'scoped memory for tpu_custom_call.1']
    #allocation5 [shape = 'u8[65536]{0}', space=vmem, size = 0x10000, scoped, tag = 'input window, operand 1, single buffered']
    #allocation6 [shape = 's32[1]{0}', space=sflag, size = 0x4, scoped, tag = 'scoped memory for tpu_custom_call.1']
    #allocation7 [shape = 'u8[65536]{0}', space=vmem, size = 0x10000, scoped, tag = 'input window, operand 3, single buffered']
    #allocation8 [shape = 'u8[65536]{0}', space=vmem, size = 0x10000, scoped, tag = 'input window, operand 5, single buffered']
    #allocation9 [shape = 's32[1]{0}', space=sflag, size = 0x4, scoped, tag = 'scoped memory for tpu_custom_call.1']
    #allocation10 [shape = 'u8[65536]{0}', space=vmem, size = 0x10000, scoped, tag = 'input window, operand 7, single buffered']
    #allocation11 [shape = 'u8[65536]{0}', space=vmem, size = 0x10000, scoped, tag = 'input window, operand 9, single buffered']
    #allocation12 [shape = 's32[1]{0}', space=sflag, size = 0x4, scoped, tag = 'scoped memory for tpu_custom_call.1']
    #allocation13 [shape = 'u8[65536]{0}', space=vmem, size = 0x10000, scoped, tag = 'input window, operand 11, single buffered']
    #allocation14 [shape = 'u8[4096]{0}', space=vmem, size = 0x1000, scoped, tag = 'output window, operand 0, single buffered']
    #allocation15 [shape = 'u8[4096]{0}', space=vmem, size = 0x1000, scoped, tag = 'output window, operand 1, single buffered']
    #allocation16 [shape = 's32[1]{0}', space=sflag, size = 0x4, scoped, tag = 'scoped memory for tpu_custom_call.1']
    #allocation17 [shape = 'u8[4096]{0}', space=vmem, size = 0x1000, scoped, tag = 'output window, operand 2, single buffered']
    #allocation18 [shape = 'u8[4096]{0}', space=vmem, size = 0x1000, scoped, tag = 'output window, operand 3, single buffered']
    #allocation19 [shape = 's32[1]{0}', space=sflag, size = 0x4, scoped, tag = 'scoped memory for tpu_custom_call.1']
    %22 = vsyncpa [#allocation3], 0
    %23 = vsyncpa [#allocation6], 0
    %24 = vsyncpa [#allocation9], 0
    %25 = vsyncpa [#allocation12], 0
    %26 = vsyncpa [#allocation4], 0
    %27 = vsyncpa [#allocation16], 0
    %28 = vsyncpa [#allocation19], 0
    // Predicated region
    $region2: #{tpu_custom_call.1} parent=1 // pred_check
      _
    $region3: #{tpu_custom_call.1} parent=1 // pred_check_branch
      %30 = sbr.rel (0) target = $region5
    $region4: #{tpu_custom_call.1} parent=1 // pred_region
      %s32 = ssub.s32 128, 128
      %33 = vsyncadd [#allocation3], %s32
      %s35 = sshll.u32 [#allocation2], 4
      %s36 = int_to_ptr.vmem [resolvable:$true] %s35
      %38 = dma.hbm_to_vmem [thread:$0]  %s0, 128, %s36, [#allocation3]
    $region5: #{tpu_custom_call.1} parent=1 // pred_fallthru
      _
    // Predicated region
    $region6: #{tpu_custom_call.1} parent=1 // pred_check
      _
    $region7: #{tpu_custom_call.1} parent=1 // pred_check_branch
      %40 = sbr.rel (0) target = $region9
    $region8: #{tpu_custom_call.1} parent=1 // pred_region
      %s42 = ssub.s32 2048, 2048
      %43 = vsyncadd [#allocation6], %s42
      %s44 = sshll.u32 [#allocation5], 4
      %s45 = int_to_ptr.vmem [resolvable:$true] %s44
      %50 = dma.hbm_to_vmem [thread:$0]  %s1, 2048, %s45, [#allocation6], 128, 128, 8
    $region9: #{tpu_custom_call.1} parent=1 // pred_fallthru
      _
    // Predicated region
    $region10: #{tpu_custom_call.1} parent=1 // pred_check
      _
    $region11: #{tpu_custom_call.1} parent=1 // pred_check_branch
      %52 = sbr.rel (0) target = $region13
    $region12: #{tpu_custom_call.1} parent=1 // pred_region
      _
    $region13: #{tpu_custom_call.1} parent=1 // pred_fallthru
      _
    // Predicated region
    $region14: #{tpu_custom_call.1} parent=1 // pred_check
      _
    $region15: #{tpu_custom_call.1} parent=1 // pred_check_branch
      %54 = sbr.rel (0) target = $region17
    $region16: #{tpu_custom_call.1} parent=1 // pred_region
      %s56 = ssub.s32 2048, 2048
      %57 = vsyncadd [#allocation6], %s56
      %s58 = sshll.u32 [#allocation7], 4
      %s59 = int_to_ptr.vmem [resolvable:$true] %s58
      %64 = dma.hbm_to_vmem [thread:$0]  %s3, 2048, %s59, [#allocation6], 128, 128, 8
    $region17: #{tpu_custom_call.1} parent=1 // pred_fallthru
      _
    // Predicated region
    $region18: #{tpu_custom_call.1} parent=1 // pred_check
      _
    $region19: #{tpu_custom_call.1} parent=1 // pred_check_branch
      %66 = sbr.rel (0) target = $region21
    $region20: #{tpu_custom_call.1} parent=1 // pred_region
      _
    $region21: #{tpu_custom_call.1} parent=1 // pred_fallthru
      _
    // Predicated region
    $region22: #{tpu_custom_call.1} parent=1 // pred_check
      _
    $region23: #{tpu_custom_call.1} parent=1 // pred_check_branch
      %68 = sbr.rel (0) target = $region25
    $region24: #{tpu_custom_call.1} parent=1 // pred_region
      %s70 = ssub.s32 2048, 2048
      %71 = vsyncadd [#allocation9], %s70
      %s72 = sshll.u32 [#allocation8], 4
      %s73 = int_to_ptr.vmem [resolvable:$true] %s72
      %78 = dma.hbm_to_vmem [thread:$0]  %s5, 2048, %s73, [#allocation9], 128, 128, 8
    $region25: #{tpu_custom_call.1} parent=1 // pred_fallthru
      _
    // Predicated region
    $region26: #{tpu_custom_call.1} parent=1 // pred_check
      _
    $region27: #{tpu_custom_call.1} parent=1 // pred_check_branch
      %80 = sbr.rel (0) target = $region29
    $region28: #{tpu_custom_call.1} parent=1 // pred_region
      _
    $region29: #{tpu_custom_call.1} parent=1 // pred_fallthru
      _
    // Predicated region
    $region30: #{tpu_custom_call.1} parent=1 // pred_check
      _
    $region31: #{tpu_custom_call.1} parent=1 // pred_check_branch
      %82 = sbr.rel (0) target = $region33
    $region32: #{tpu_custom_call.1} parent=1 // pred_region
      %s84 = ssub.s32 2048, 2048
      %85 = vsyncadd [#allocation9], %s84
      %s86 = sshll.u32 [#allocation10], 4
      %s87 = int_to_ptr.vmem [resolvable:$true] %s86
      %92 = dma.hbm_to_vmem [thread:$0]  %s7, 2048, %s87, [#allocation9], 128, 128, 8
    $region33: #{tpu_custom_call.1} parent=1 // pred_fallthru
      _
    // Predicated region
    $region34: #{tpu_custom_call.1} parent=1 // pred_check
      _
    $region35: #{tpu_custom_call.1} parent=1 // pred_check_branch
      %94 = sbr.rel (0) target = $region37
    $region36: #{tpu_custom_call.1} parent=1 // pred_region
      _
    $region37: #{tpu_custom_call.1} parent=1 // pred_fallthru
      _
    // Predicated region
    $region38: #{tpu_custom_call.1} parent=1 // pred_check
      _
    $region39: #{tpu_custom_call.1} parent=1 // pred_check_branch
      %96 = sbr.rel (0) target = $region41
    $region40: #{tpu_custom_call.1} parent=1 // pred_region
      %s98 = ssub.s32 2048, 2048
      %99 = vsyncadd [#allocation12], %s98
      %s100 = sshll.u32 [#allocation11], 4
      %s101 = int_to_ptr.vmem [resolvable:$true] %s100
      %106 = dma.hbm_to_vmem [thread:$0]  %s9, 2048, %s101, [#allocation12], 128, 128, 8
    $region41: #{tpu_custom_call.1} parent=1 // pred_fallthru
      _
    // Predicated region
    $region42: #{tpu_custom_call.1} parent=1 // pred_check
      _
    $region43: #{tpu_custom_call.1} parent=1 // pred_check_branch
      %108 = sbr.rel (0) target = $region45
    $region44: #{tpu_custom_call.1} parent=1 // pred_region
      _
    $region45: #{tpu_custom_call.1} parent=1 // pred_fallthru
      _
    // Predicated region
    $region46: #{tpu_custom_call.1} parent=1 // pred_check
      _
    $region47: #{tpu_custom_call.1} parent=1 // pred_check_branch
      %110 = sbr.rel (0) target = $region49
    $region48: #{tpu_custom_call.1} parent=1 // pred_region
      %s112 = ssub.s32 2048, 2048
      %113 = vsyncadd [#allocation12], %s112
      %s114 = sshll.u32 [#allocation13], 4
      %s115 = int_to_ptr.vmem [resolvable:$true] %s114
      %120 = dma.hbm_to_vmem [thread:$0]  %s11, 2048, %s115, [#allocation12], 128, 128, 8
    $region49: #{tpu_custom_call.1} parent=1 // pred_fallthru
      _
    // Predicated region
    $region50: #{tpu_custom_call.1} parent=1 // pred_check
      _
    $region51: #{tpu_custom_call.1} parent=1 // pred_check_branch
      %122 = sbr.rel (0) target = $region53
    $region52: #{tpu_custom_call.1} parent=1 // pred_region
      _
    $region53: #{tpu_custom_call.1} parent=1 // pred_fallthru
      _
    // Predicated region
    $region54: #{tpu_custom_call.1} parent=1 // pred_check
      _
    $region55: #{tpu_custom_call.1} parent=1 // pred_check_branch
      %124 = sbr.rel (0) target = $region57
    $region56: #{tpu_custom_call.1} parent=1 // pred_region
      %125 = dma.done [#allocation3], 128
    $region57: #{tpu_custom_call.1} parent=1 // pred_fallthru
      _
    // Predicated region
    $region58: #{tpu_custom_call.1} parent=1 // pred_check
      _
    $region59: #{tpu_custom_call.1} parent=1 // pred_check_branch
      %127 = sbr.rel (0) target = $region61
    $region60: #{tpu_custom_call.1} parent=1 // pred_region
      %128 = dma.done [#allocation6], 2048
    $region61: #{tpu_custom_call.1} parent=1 // pred_fallthru
      _
    // Predicated region
    $region62: #{tpu_custom_call.1} parent=1 // pred_check
      _
    $region63: #{tpu_custom_call.1} parent=1 // pred_check_branch
      %130 = sbr.rel (0) target = $region65
    $region64: #{tpu_custom_call.1} parent=1 // pred_region
      %131 = dma.done [#allocation6], 2048
    $region65: #{tpu_custom_call.1} parent=1 // pred_fallthru
      _
    // Predicated region
    $region66: #{tpu_custom_call.1} parent=1 // pred_check
      _
    $region67: #{tpu_custom_call.1} parent=1 // pred_check_branch
      %133 = sbr.rel (0) target = $region69
    $region68: #{tpu_custom_call.1} parent=1 // pred_region
      %134 = dma.done [#allocation9], 2048
    $region69: #{tpu_custom_call.1} parent=1 // pred_fallthru
      _
    // Predicated region
    $region70: #{tpu_custom_call.1} parent=1 // pred_check
      _
    $region71: #{tpu_custom_call.1} parent=1 // pred_check_branch
      %136 = sbr.rel (0) target = $region73
    $region72: #{tpu_custom_call.1} parent=1 // pred_region
      %137 = dma.done [#allocation9], 2048
    $region73: #{tpu_custom_call.1} parent=1 // pred_fallthru
      _
    // Predicated region
    $region74: #{tpu_custom_call.1} parent=1 // pred_check
      _
    $region75: #{tpu_custom_call.1} parent=1 // pred_check_branch
      %139 = sbr.rel (0) target = $region77
    $region76: #{tpu_custom_call.1} parent=1 // pred_region
      %140 = dma.done [#allocation12], 2048
    $region77: #{tpu_custom_call.1} parent=1 // pred_fallthru
      _
    // Predicated region
    $region78: #{tpu_custom_call.1} parent=1 // pred_check
      _
    $region79: #{tpu_custom_call.1} parent=1 // pred_check_branch
      %142 = sbr.rel (0) target = $region81
    $region80: #{tpu_custom_call.1} parent=1 // pred_region
      %143 = dma.done [#allocation12], 2048
    $region81: #{tpu_custom_call.1} parent=1 // pred_fallthru
      _
    %v144 = vld [vmem:[#allocation2] sm:$0xff]
    %v145 = vld [vmem:[#allocation5] sm:$0xff]
    %v146 = vld [vmem:[#allocation5 + $0x8] sm:$0xff]
    %v147 = vld [vmem:[#allocation5 + $0x10] sm:$0xff]
    %v148 = vld [vmem:[#allocation5 + $0x18] sm:$0xff]
    %v149 = vld [vmem:[#allocation5 + $0x20] sm:$0xff]
    %v150 = vld [vmem:[#allocation5 + $0x28] sm:$0xff]
    %v151 = vld [vmem:[#allocation5 + $0x30] sm:$0xff]
    %v152 = vld [vmem:[#allocation5 + $0x38] sm:$0xff]
    %v153 = vld [vmem:[#allocation5 + $0x40] sm:$0xff]
    %v154 = vld [vmem:[#allocation5 + $0x48] sm:$0xff]
    %v155 = vld [vmem:[#allocation5 + $0x50] sm:$0xff]
    %v156 = vld [vmem:[#allocation5 + $0x58] sm:$0xff]
    %v157 = vld [vmem:[#allocation5 + $0x60] sm:$0xff]
    %v158 = vld [vmem:[#allocation5 + $0x68] sm:$0xff]
    %v159 = vld [vmem:[#allocation5 + $0x70] sm:$0xff]
    %v160 = vld [vmem:[#allocation5 + $0x78] sm:$0xff]
    %v161 = vld [vmem:[%s2] sm:$0x1]
    %v163 = vlaneseq
    %v164 = vshrl.u32 %v163, 7
    %v165 = vsub.s32 0, %v164
    %v166 = vrot.slane %v161, %v165
    %168 = vmatprep.subr.mxu0 0.0
    %169 = vmatpush1.msra.mxu0 %v145
    %170 = vmatprep.subr.mxu0 0.0
    %171 = vmatpush1.msra.mxu0 %v146
    %172 = vmatprep.subr.mxu0 0.0
    %173 = vmatpush1.msra.mxu0 %v147
    %174 = vmatprep.subr.mxu0 0.0
    %175 = vmatpush1.msra.mxu0 %v148
    %176 = vmatprep.subr.mxu0 0.0
    %177 = vmatpush1.msra.mxu0 %v149
    %178 = vmatprep.subr.mxu0 0.0
    %179 = vmatpush1.msra.mxu0 %v150
    %180 = vmatprep.subr.mxu0 0.0
    %181 = vmatpush1.msra.mxu0 %v151
    %182 = vmatprep.subr.mxu0 0.0
    %183 = vmatpush1.msra.mxu0 %v152
    %184 = vmatprep.subr.mxu0 0.0
    %185 = vmatpush1.msra.mxu0 %v153
    %186 = vmatprep.subr.mxu0 0.0
    %187 = vmatpush1.msra.mxu0 %v154
    %188 = vmatprep.subr.mxu0 0.0
    %189 = vmatpush1.msra.mxu0 %v155
    %190 = vmatprep.subr.mxu0 0.0
    %191 = vmatpush1.msra.mxu0 %v156
    %192 = vmatprep.subr.mxu0 0.0
    %193 = vmatpush1.msra.mxu0 %v157
    %194 = vmatprep.subr.mxu0 0.0
    %195 = vmatpush1.msra.mxu0 %v158
    %196 = vmatprep.subr.mxu0 0.0
    %197 = vmatpush1.msra.mxu0 %v159
    %198 = vmatprep.subr.mxu0 0.0
    %199 = vmatpush1.msra.mxu0 %v160
    %200 = vmatprep.subr.mxu0 0.0
    %201 = vmatpush1.msra.mxu0 0.0
    %202 = vmatprep.subr.mxu0 0.0
    %203 = vmatpush1.msra.mxu0 0.0
    %204 = vmatprep.subr.mxu0 0.0
    %205 = vmatpush1.msra.mxu0 0.0
    %206 = vmatprep.subr.mxu0 0.0
    %207 = vmatpush1.msra.mxu0 0.0
    %208 = vmatprep.subr.mxu0 0.0
    %209 = vmatpush1.msra.mxu0 0.0
    %210 = vmatprep.subr.mxu0 0.0
    %211 = vmatpush1.msra.mxu0 0.0
    %212 = vmatprep.subr.mxu0 0.0
    %213 = vmatpush1.msra.mxu0 0.0
    %214 = vmatprep.subr.mxu0 0.0
    %215 = vmatpush1.msra.mxu0 0.0
    %216 = vmatprep.subr.mxu0 0.0
    %217 = vmatpush1.msra.mxu0 0.0
    %218 = vmatprep.subr.mxu0 0.0
    %219 = vmatpush1.msra.mxu0 0.0
    %220 = vmatprep.subr.mxu0 0.0
    %221 = vmatpush1.msra.mxu0 0.0
    %222 = vmatprep.subr.mxu0 0.0
    %223 = vmatpush1.msra.mxu0 0.0
    %224 = vmatprep.subr.mxu0 0.0
    %225 = vmatpush1.msra.mxu0 0.0
    %226 = vmatprep.subr.mxu0 0.0
    %227 = vmatpush1.msra.mxu0 0.0
    %228 = vmatprep.subr.mxu0 0.0
    %229 = vmatpush1.msra.mxu0 0.0
    %230 = vmatprep.subr.mxu0 0.0
    %231 = vmatpush1.msra.mxu0 0.0
    %232 = vmatprep.mubr.f32.mxu0 0.0
    %233 = vmatmul.mubr.f32.gmra.mrb[0].mxu0 %v144
    %v234 = vpop.f32.mrb[0].mxu0
    %v235 = vadd.f32 %v166, %v234
    %v236 = vpop.f32.mrb[0].mxu0
    %237 = vdwg.mxu0
    %v238 = vmax.f32 %v235, 0.0
    %v239 = vld [vmem:[#allocation7] sm:$0xff]
    %v240 = vld [vmem:[#allocation7 + $0x8] sm:$0xff]
    %v241 = vld [vmem:[#allocation7 + $0x10] sm:$0xff]
    %v242 = vld [vmem:[#allocation7 + $0x18] sm:$0xff]
    %v243 = vld [vmem:[#allocation7 + $0x20] sm:$0xff]
    %v244 = vld [vmem:[#allocation7 + $0x28] sm:$0xff]
    %v245 = vld [vmem:[#allocation7 + $0x30] sm:$0xff]
    %v246 = vld [vmem:[#allocation7 + $0x38] sm:$0xff]
    %v247 = vld [vmem:[#allocation7 + $0x40] sm:$0xff]
    %v248 = vld [vmem:[#allocation7 + $0x48] sm:$0xff]
    %v249 = vld [vmem:[#allocation7 + $0x50] sm:$0xff]
    %v250 = vld [vmem:[#allocation7 + $0x58] sm:$0xff]
    %v251 = vld [vmem:[#allocation7 + $0x60] sm:$0xff]
    %v252 = vld [vmem:[#allocation7 + $0x68] sm:$0xff]
    %v253 = vld [vmem:[#allocation7 + $0x70] sm:$0xff]
    %v254 = vld [vmem:[#allocation7 + $0x78] sm:$0xff]
    %v255 = vld [vmem:[%s4] sm:$0x1]
    %v257 = vlaneseq
    %v258 = vshrl.u32 %v257, 7
    %v259 = vsub.s32 0, %v258
    %v260 = vrot.slane %v255, %v259
    %262 = vmatprep.subr.mxu0 0.0
    %263 = vmatpush1.msra.mxu0 %v239
    %264 = vmatprep.subr.mxu0 0.0
    %265 = vmatpush1.msra.mxu0 %v240
    %266 = vmatprep.subr.mxu0 0.0
    %267 = vmatpush1.msra.mxu0 %v241
    %268 = vmatprep.subr.mxu0 0.0
    %269 = vmatpush1.msra.mxu0 %v242
    %270 = vmatprep.subr.mxu0 0.0
    %271 = vmatpush1.msra.mxu0 %v243
    %272 = vmatprep.subr.mxu0 0.0
    %273 = vmatpush1.msra.mxu0 %v244
    %274 = vmatprep.subr.mxu0 0.0
    %275 = vmatpush1.msra.mxu0 %v245
    %276 = vmatprep.subr.mxu0 0.0
    %277 = vmatpush1.msra.mxu0 %v246
    %278 = vmatprep.subr.mxu0 0.0
    %279 = vmatpush1.msra.mxu0 %v247
    %280 = vmatprep.subr.mxu0 0.0
    %281 = vmatpush1.msra.mxu0 %v248
    %282 = vmatprep.subr.mxu0 0.0
    %283 = vmatpush1.msra.mxu0 %v249
    %284 = vmatprep.subr.mxu0 0.0
    %285 = vmatpush1.msra.mxu0 %v250
    %286 = vmatprep.subr.mxu0 0.0
    %287 = vmatpush1.msra.mxu0 %v251
    %288 = vmatprep.subr.mxu0 0.0
    %289 = vmatpush1.msra.mxu0 %v252
    %290 = vmatprep.subr.mxu0 0.0
    %291 = vmatpush1.msra.mxu0 %v253
    %292 = vmatprep.subr.mxu0 0.0
    %293 = vmatpush1.msra.mxu0 %v254
    %294 = vmatprep.subr.mxu0 0.0
    %295 = vmatpush1.msra.mxu0 0.0
    %296 = vmatprep.subr.mxu0 0.0
    %297 = vmatpush1.msra.mxu0 0.0
    %298 = vmatprep.subr.mxu0 0.0
    %299 = vmatpush1.msra.mxu0 0.0
    %300 = vmatprep.subr.mxu0 0.0
    %301 = vmatpush1.msra.mxu0 0.0
    %302 = vmatprep.subr.mxu0 0.0
    %303 = vmatpush1.msra.mxu0 0.0
    %304 = vmatprep.subr.mxu0 0.0
    %305 = vmatpush1.msra.mxu0 0.0
    %306 = vmatprep.subr.mxu0 0.0
    %307 = vmatpush1.msra.mxu0 0.0
    %308 = vmatprep.subr.mxu0 0.0
    %309 = vmatpush1.msra.mxu0 0.0
    %310 = vmatprep.subr.mxu0 0.0
    %311 = vmatpush1.msra.mxu0 0.0
    %312 = vmatprep.subr.mxu0 0.0
    %313 = vmatpush1.msra.mxu0 0.0
    %314 = vmatprep.subr.mxu0 0.0
    %315 = vmatpush1.msra.mxu0 0.0
    %316 = vmatprep.subr.mxu0 0.0
    %317 = vmatpush1.msra.mxu0 0.0
    %318 = vmatprep.subr.mxu0 0.0
    %319 = vmatpush1.msra.mxu0 0.0
    %320 = vmatprep.subr.mxu0 0.0
    %321 = vmatpush1.msra.mxu0 0.0
    %322 = vmatprep.subr.mxu0 0.0
    %323 = vmatpush1.msra.mxu0 0.0
    %324 = vmatprep.subr.mxu0 0.0
    %325 = vmatpush1.msra.mxu0 0.0
    %326 = vmatprep.mubr.f32.mxu0 0.0
    %327 = vmatmul.mubr.f32.gmra.mrb[0].mxu0 %v238
    %v328 = vpop.f32.mrb[0].mxu0
    %v329 = vadd.f32 %v260, %v328
    %v330 = vpop.f32.mrb[0].mxu0
    %331 = vdwg.mxu0
    %332 = vst [vmem:[#allocation14] sm:$0xff] %v329
    %v333 = vld [vmem:[#allocation8] sm:$0xff]
    %v334 = vld [vmem:[#allocation8 + $0x8] sm:$0xff]
    %v335 = vld [vmem:[#allocation8 + $0x10] sm:$0xff]
    %v336 = vld [vmem:[#allocation8 + $0x18] sm:$0xff]
    %v337 = vld [vmem:[#allocation8 + $0x20] sm:$0xff]
    %v338 = vld [vmem:[#allocation8 + $0x28] sm:$0xff]
    %v339 = vld [vmem:[#allocation8 + $0x30] sm:$0xff]
    %v340 = vld [vmem:[#allocation8 + $0x38] sm:$0xff]
    %v341 = vld [vmem:[#allocation8 + $0x40] sm:$0xff]
    %v342 = vld [vmem:[#allocation8 + $0x48] sm:$0xff]
    %v343 = vld [vmem:[#allocation8 + $0x50] sm:$0xff]
    %v344 = vld [vmem:[#allocation8 + $0x58] sm:$0xff]
    %v345 = vld [vmem:[#allocation8 + $0x60] sm:$0xff]
    %v346 = vld [vmem:[#allocation8 + $0x68] sm:$0xff]
    %v347 = vld [vmem:[#allocation8 + $0x70] sm:$0xff]
    %v348 = vld [vmem:[#allocation8 + $0x78] sm:$0xff]
    %v349 = vld [vmem:[%s6] sm:$0x1]
    %v351 = vlaneseq
    %v352 = vshrl.u32 %v351, 7
    %v353 = vsub.s32 0, %v352
    %v354 = vrot.slane %v349, %v353
    %356 = vmatprep.subr.mxu0 0.0
    %357 = vmatpush1.msra.mxu0 %v333
    %358 = vmatprep.subr.mxu0 0.0
    %359 = vmatpush1.msra.mxu0 %v334
    %360 = vmatprep.subr.mxu0 0.0
    %361 = vmatpush1.msra.mxu0 %v335
    %362 = vmatprep.subr.mxu0 0.0
    %363 = vmatpush1.msra.mxu0 %v336
    %364 = vmatprep.subr.mxu0 0.0
    %365 = vmatpush1.msra.mxu0 %v337
    %366 = vmatprep.subr.mxu0 0.0
    %367 = vmatpush1.msra.mxu0 %v338
    %368 = vmatprep.subr.mxu0 0.0
    %369 = vmatpush1.msra.mxu0 %v339
    %370 = vmatprep.subr.mxu0 0.0
    %371 = vmatpush1.msra.mxu0 %v340
    %372 = vmatprep.subr.mxu0 0.0
    %373 = vmatpush1.msra.mxu0 %v341
    %374 = vmatprep.subr.mxu0 0.0
    %375 = vmatpush1.msra.mxu0 %v342
    %376 = vmatprep.subr.mxu0 0.0
    %377 = vmatpush1.msra.mxu0 %v343
    %378 = vmatprep.subr.mxu0 0.0
    %379 = vmatpush1.msra.mxu0 %v344
    %380 = vmatprep.subr.mxu0 0.0
    %381 = vmatpush1.msra.mxu0 %v345
    %382 = vmatprep.subr.mxu0 0.0
    %383 = vmatpush1.msra.mxu0 %v346
    %384 = vmatprep.subr.mxu0 0.0
    %385 = vmatpush1.msra.mxu0 %v347
    %386 = vmatprep.subr.mxu0 0.0
    %387 = vmatpush1.msra.mxu0 %v348
    %388 = vmatprep.subr.mxu0 0.0
    %389 = vmatpush1.msra.mxu0 0.0
    %390 = vmatprep.subr.mxu0 0.0
    %391 = vmatpush1.msra.mxu0 0.0
    %392 = vmatprep.subr.mxu0 0.0
    %393 = vmatpush1.msra.mxu0 0.0
    %394 = vmatprep.subr.mxu0 0.0
    %395 = vmatpush1.msra.mxu0 0.0
    %396 = vmatprep.subr.mxu0 0.0
    %397 = vmatpush1.msra.mxu0 0.0
    %398 = vmatprep.subr.mxu0 0.0
    %399 = vmatpush1.msra.mxu0 0.0
    %400 = vmatprep.subr.mxu0 0.0
    %401 = vmatpush1.msra.mxu0 0.0
    %402 = vmatprep.subr.mxu0 0.0
    %403 = vmatpush1.msra.mxu0 0.0
    %404 = vmatprep.subr.mxu0 0.0
    %405 = vmatpush1.msra.mxu0 0.0
    %406 = vmatprep.subr.mxu0 0.0
    %407 = vmatpush1.msra.mxu0 0.0
    %408 = vmatprep.subr.mxu0 0.0
    %409 = vmatpush1.msra.mxu0 0.0
    %410 = vmatprep.subr.mxu0 0.0
    %411 = vmatpush1.msra.mxu0 0.0
    %412 = vmatprep.subr.mxu0 0.0
    %413 = vmatpush1.msra.mxu0 0.0
    %414 = vmatprep.subr.mxu0 0.0
    %415 = vmatpush1.msra.mxu0 0.0
    %416 = vmatprep.subr.mxu0 0.0
    %417 = vmatpush1.msra.mxu0 0.0
    %418 = vmatprep.subr.mxu0 0.0
    %419 = vmatpush1.msra.mxu0 0.0
    %420 = vmatprep.mubr.f32.mxu0 0.0
    %421 = vmatmul.mubr.f32.gmra.mrb[0].mxu0 %v329
    %v422 = vpop.f32.mrb[0].mxu0
    %v423 = vadd.f32 %v354, %v422
    %v424 = vpop.f32.mrb[0].mxu0
    %425 = vdwg.mxu0
    %v426 = vmax.f32 %v423, 0.0
    %v427 = vld [vmem:[#allocation10] sm:$0xff]
    %v428 = vld [vmem:[#allocation10 + $0x8] sm:$0xff]
    %v429 = vld [vmem:[#allocation10 + $0x10] sm:$0xff]
    %v430 = vld [vmem:[#allocation10 + $0x18] sm:$0xff]
    %v431 = vld [vmem:[#allocation10 + $0x20] sm:$0xff]
    %v432 = vld [vmem:[#allocation10 + $0x28] sm:$0xff]
    %v433 = vld [vmem:[#allocation10 + $0x30] sm:$0xff]
    %v434 = vld [vmem:[#allocation10 + $0x38] sm:$0xff]
    %v435 = vld [vmem:[#allocation10 + $0x40] sm:$0xff]
    %v436 = vld [vmem:[#allocation10 + $0x48] sm:$0xff]
    %v437 = vld [vmem:[#allocation10 + $0x50] sm:$0xff]
    %v438 = vld [vmem:[#allocation10 + $0x58] sm:$0xff]
    %v439 = vld [vmem:[#allocation10 + $0x60] sm:$0xff]
    %v440 = vld [vmem:[#allocation10 + $0x68] sm:$0xff]
    %v441 = vld [vmem:[#allocation10 + $0x70] sm:$0xff]
    %v442 = vld [vmem:[#allocation10 + $0x78] sm:$0xff]
    %v443 = vld [vmem:[%s8] sm:$0x1]
    %v445 = vlaneseq
    %v446 = vshrl.u32 %v445, 7
    %v447 = vsub.s32 0, %v446
    %v448 = vrot.slane %v443, %v447
    %450 = vmatprep.subr.mxu0 0.0
    %451 = vmatpush1.msra.mxu0 %v427
    %452 = vmatprep.subr.mxu0 0.0
    %453 = vmatpush1.msra.mxu0 %v428
    %454 = vmatprep.subr.mxu0 0.0
    %455 = vmatpush1.msra.mxu0 %v429
    %456 = vmatprep.subr.mxu0 0.0
    %457 = vmatpush1.msra.mxu0 %v430
    %458 = vmatprep.subr.mxu0 0.0
    %459 = vmatpush1.msra.mxu0 %v431
    %460 = vmatprep.subr.mxu0 0.0
    %461 = vmatpush1.msra.mxu0 %v432
    %462 = vmatprep.subr.mxu0 0.0
    %463 = vmatpush1.msra.mxu0 %v433
    %464 = vmatprep.subr.mxu0 0.0
    %465 = vmatpush1.msra.mxu0 %v434
    %466 = vmatprep.subr.mxu0 0.0
    %467 = vmatpush1.msra.mxu0 %v435
    %468 = vmatprep.subr.mxu0 0.0
    %469 = vmatpush1.msra.mxu0 %v436
    %470 = vmatprep.subr.mxu0 0.0
    %471 = vmatpush1.msra.mxu0 %v437
    %472 = vmatprep.subr.mxu0 0.0
    %473 = vmatpush1.msra.mxu0 %v438
    %474 = vmatprep.subr.mxu0 0.0
    %475 = vmatpush1.msra.mxu0 %v439
    %476 = vmatprep.subr.mxu0 0.0
    %477 = vmatpush1.msra.mxu0 %v440
    %478 = vmatprep.subr.mxu0 0.0
    %479 = vmatpush1.msra.mxu0 %v441
    %480 = vmatprep.subr.mxu0 0.0
    %481 = vmatpush1.msra.mxu0 %v442
    %482 = vmatprep.subr.mxu0 0.0
    %483 = vmatpush1.msra.mxu0 0.0
    %484 = vmatprep.subr.mxu0 0.0
    %485 = vmatpush1.msra.mxu0 0.0
    %486 = vmatprep.subr.mxu0 0.0
    %487 = vmatpush1.msra.mxu0 0.0
    %488 = vmatprep.subr.mxu0 0.0
    %489 = vmatpush1.msra.mxu0 0.0
    %490 = vmatprep.subr.mxu0 0.0
    %491 = vmatpush1.msra.mxu0 0.0
    %492 = vmatprep.subr.mxu0 0.0
    %493 = vmatpush1.msra.mxu0 0.0
    %494 = vmatprep.subr.mxu0 0.0
    %495 = vmatpush1.msra.mxu0 0.0
    %496 = vmatprep.subr.mxu0 0.0
    %497 = vmatpush1.msra.mxu0 0.0
    %498 = vmatprep.subr.mxu0 0.0
    %499 = vmatpush1.msra.mxu0 0.0
    %500 = vmatprep.subr.mxu0 0.0
    %501 = vmatpush1.msra.mxu0 0.0
    %502 = vmatprep.subr.mxu0 0.0
    %503 = vmatpush1.msra.mxu0 0.0
    %504 = vmatprep.subr.mxu0 0.0
    %505 = vmatpush1.msra.mxu0 0.0
    %506 = vmatprep.subr.mxu0 0.0
    %507 = vmatpush1.msra.mxu0 0.0
    %508 = vmatprep.subr.mxu0 0.0
    %509 = vmatpush1.msra.mxu0 0.0
    %510 = vmatprep.subr.mxu0 0.0
    %511 = vmatpush1.msra.mxu0 0.0
    %512 = vmatprep.subr.mxu0 0.0
    %513 = vmatpush1.msra.mxu0 0.0
    %514 = vmatprep.mubr.f32.mxu0 0.0
    %515 = vmatmul.mubr.f32.gmra.mrb[0].mxu0 %v426
    %v516 = vpop.f32.mrb[0].mxu0
    %v517 = vadd.f32 %v448, %v516
    %v518 = vpop.f32.mrb[0].mxu0
    %519 = vdwg.mxu0
    %520 = vst [vmem:[#allocation15] sm:$0xff] %v517
    %v521 = vld [vmem:[#allocation11] sm:$0xff]
    %v522 = vld [vmem:[#allocation11 + $0x8] sm:$0xff]
    %v523 = vld [vmem:[#allocation11 + $0x10] sm:$0xff]
    %v524 = vld [vmem:[#allocation11 + $0x18] sm:$0xff]
    %v525 = vld [vmem:[#allocation11 + $0x20] sm:$0xff]
    %v526 = vld [vmem:[#allocation11 + $0x28] sm:$0xff]
    %v527 = vld [vmem:[#allocation11 + $0x30] sm:$0xff]
    %v528 = vld [vmem:[#allocation11 + $0x38] sm:$0xff]
    %v529 = vld [vmem:[#allocation11 + $0x40] sm:$0xff]
    %v530 = vld [vmem:[#allocation11 + $0x48] sm:$0xff]
    %v531 = vld [vmem:[#allocation11 + $0x50] sm:$0xff]
    %v532 = vld [vmem:[#allocation11 + $0x58] sm:$0xff]
    %v533 = vld [vmem:[#allocation11 + $0x60] sm:$0xff]
    %v534 = vld [vmem:[#allocation11 + $0x68] sm:$0xff]
    %v535 = vld [vmem:[#allocation11 + $0x70] sm:$0xff]
    %v536 = vld [vmem:[#allocation11 + $0x78] sm:$0xff]
    %v537 = vld [vmem:[%s10] sm:$0x1]
    %v539 = vlaneseq
    %v540 = vshrl.u32 %v539, 7
    %v541 = vsub.s32 0, %v540
    %v542 = vrot.slane %v537, %v541
    %544 = vmatprep.subr.mxu0 0.0
    %545 = vmatpush1.msra.mxu0 %v521
    %546 = vmatprep.subr.mxu0 0.0
    %547 = vmatpush1.msra.mxu0 %v522
    %548 = vmatprep.subr.mxu0 0.0
    %549 = vmatpush1.msra.mxu0 %v523
    %550 = vmatprep.subr.mxu0 0.0
    %551 = vmatpush1.msra.mxu0 %v524
    %552 = vmatprep.subr.mxu0 0.0
    %553 = vmatpush1.msra.mxu0 %v525
    %554 = vmatprep.subr.mxu0 0.0
    %555 = vmatpush1.msra.mxu0 %v526
    %556 = vmatprep.subr.mxu0 0.0
    %557 = vmatpush1.msra.mxu0 %v527
    %558 = vmatprep.subr.mxu0 0.0
    %559 = vmatpush1.msra.mxu0 %v528
    %560 = vmatprep.subr.mxu0 0.0
    %561 = vmatpush1.msra.mxu0 %v529
    %562 = vmatprep.subr.mxu0 0.0
    %563 = vmatpush1.msra.mxu0 %v530
    %564 = vmatprep.subr.mxu0 0.0
    %565 = vmatpush1.msra.mxu0 %v531
    %566 = vmatprep.subr.mxu0 0.0
    %567 = vmatpush1.msra.mxu0 %v532
    %568 = vmatprep.subr.mxu0 0.0
    %569 = vmatpush1.msra.mxu0 %v533
    %570 = vmatprep.subr.mxu0 0.0
    %571 = vmatpush1.msra.mxu0 %v534
    %572 = vmatprep.subr.mxu0 0.0
    %573 = vmatpush1.msra.mxu0 %v535
    %574 = vmatprep.subr.mxu0 0.0
    %575 = vmatpush1.msra.mxu0 %v536
    %576 = vmatprep.subr.mxu0 0.0
    %577 = vmatpush1.msra.mxu0 0.0
    %578 = vmatprep.subr.mxu0 0.0
    %579 = vmatpush1.msra.mxu0 0.0
    %580 = vmatprep.subr.mxu0 0.0
    %581 = vmatpush1.msra.mxu0 0.0
    %582 = vmatprep.subr.mxu0 0.0
    %583 = vmatpush1.msra.mxu0 0.0
    %584 = vmatprep.subr.mxu0 0.0
    %585 = vmatpush1.msra.mxu0 0.0
    %586 = vmatprep.subr.mxu0 0.0
    %587 = vmatpush1.msra.mxu0 0.0
    %588 = vmatprep.subr.mxu0 0.0
    %589 = vmatpush1.msra.mxu0 0.0
    %590 = vmatprep.subr.mxu0 0.0
    %591 = vmatpush1.msra.mxu0 0.0
    %592 = vmatprep.subr.mxu0 0.0
    %593 = vmatpush1.msra.mxu0 0.0
    %594 = vmatprep.subr.mxu0 0.0
    %595 = vmatpush1.msra.mxu0 0.0
    %596 = vmatprep.subr.mxu0 0.0
    %597 = vmatpush1.msra.mxu0 0.0
    %598 = vmatprep.subr.mxu0 0.0
    %599 = vmatpush1.msra.mxu0 0.0
    %600 = vmatprep.subr.mxu0 0.0
    %601 = vmatpush1.msra.mxu0 0.0
    %602 = vmatprep.subr.mxu0 0.0
    %603 = vmatpush1.msra.mxu0 0.0
    %604 = vmatprep.subr.mxu0 0.0
    %605 = vmatpush1.msra.mxu0 0.0
    %606 = vmatprep.subr.mxu0 0.0
    %607 = vmatpush1.msra.mxu0 0.0
    %608 = vmatprep.mubr.f32.mxu0 0.0
    %609 = vmatmul.mubr.f32.gmra.mrb[0].mxu0 %v329
    %v610 = vpop.f32.mrb[0].mxu0
    %v611 = vadd.f32 %v542, %v610
    %v612 = vpop.f32.mrb[0].mxu0
    %613 = vdwg.mxu0
    %v614 = vmax.f32 %v611, 0.0
    %v615 = vld [vmem:[#allocation13] sm:$0xff]
    %v616 = vld [vmem:[#allocation13 + $0x8] sm:$0xff]
    %v617 = vld [vmem:[#allocation13 + $0x10] sm:$0xff]
    %v618 = vld [vmem:[#allocation13 + $0x18] sm:$0xff]
    %v619 = vld [vmem:[#allocation13 + $0x20] sm:$0xff]
    %v620 = vld [vmem:[#allocation13 + $0x28] sm:$0xff]
    %v621 = vld [vmem:[#allocation13 + $0x30] sm:$0xff]
    %v622 = vld [vmem:[#allocation13 + $0x38] sm:$0xff]
    %v623 = vld [vmem:[#allocation13 + $0x40] sm:$0xff]
    %v624 = vld [vmem:[#allocation13 + $0x48] sm:$0xff]
    %v625 = vld [vmem:[#allocation13 + $0x50] sm:$0xff]
    %v626 = vld [vmem:[#allocation13 + $0x58] sm:$0xff]
    %v627 = vld [vmem:[#allocation13 + $0x60] sm:$0xff]
    %v628 = vld [vmem:[#allocation13 + $0x68] sm:$0xff]
    %v629 = vld [vmem:[#allocation13 + $0x70] sm:$0xff]
    %v630 = vld [vmem:[#allocation13 + $0x78] sm:$0xff]
    %v631 = vld [vmem:[%s12] sm:$0x1]
    %v633 = vlaneseq
    %v634 = vshrl.u32 %v633, 7
    %v635 = vsub.s32 0, %v634
    %v636 = vrot.slane %v631, %v635
    %638 = vmatprep.subr.mxu0 0.0
    %639 = vmatpush1.msra.mxu0 %v615
    %640 = vmatprep.subr.mxu0 0.0
    %641 = vmatpush1.msra.mxu0 %v616
    %642 = vmatprep.subr.mxu0 0.0
    %643 = vmatpush1.msra.mxu0 %v617
    %644 = vmatprep.subr.mxu0 0.0
    %645 = vmatpush1.msra.mxu0 %v618
    %646 = vmatprep.subr.mxu0 0.0
    %647 = vmatpush1.msra.mxu0 %v619
    %648 = vmatprep.subr.mxu0 0.0
    %649 = vmatpush1.msra.mxu0 %v620
    %650 = vmatprep.subr.mxu0 0.0
    %651 = vmatpush1.msra.mxu0 %v621
    %652 = vmatprep.subr.mxu0 0.0
    %653 = vmatpush1.msra.mxu0 %v622
    %654 = vmatprep.subr.mxu0 0.0
    %655 = vmatpush1.msra.mxu0 %v623
    %656 = vmatprep.subr.mxu0 0.0
    %657 = vmatpush1.msra.mxu0 %v624
    %658 = vmatprep.subr.mxu0 0.0
    %659 = vmatpush1.msra.mxu0 %v625
    %660 = vmatprep.subr.mxu0 0.0
    %661 = vmatpush1.msra.mxu0 %v626
    %662 = vmatprep.subr.mxu0 0.0
    %663 = vmatpush1.msra.mxu0 %v627
    %664 = vmatprep.subr.mxu0 0.0
    %665 = vmatpush1.msra.mxu0 %v628
    %666 = vmatprep.subr.mxu0 0.0
    %667 = vmatpush1.msra.mxu0 %v629
    %668 = vmatprep.subr.mxu0 0.0
    %669 = vmatpush1.msra.mxu0 %v630
    %670 = vmatprep.subr.mxu0 0.0
    %671 = vmatpush1.msra.mxu0 0.0
    %672 = vmatprep.subr.mxu0 0.0
    %673 = vmatpush1.msra.mxu0 0.0
    %674 = vmatprep.subr.mxu0 0.0
    %675 = vmatpush1.msra.mxu0 0.0
    %676 = vmatprep.subr.mxu0 0.0
    %677 = vmatpush1.msra.mxu0 0.0
    %678 = vmatprep.subr.mxu0 0.0
    %679 = vmatpush1.msra.mxu0 0.0
    %680 = vmatprep.subr.mxu0 0.0
    %681 = vmatpush1.msra.mxu0 0.0
    %682 = vmatprep.subr.mxu0 0.0
    %683 = vmatpush1.msra.mxu0 0.0
    %684 = vmatprep.subr.mxu0 0.0
    %685 = vmatpush1.msra.mxu0 0.0
    %686 = vmatprep.subr.mxu0 0.0
    %687 = vmatpush1.msra.mxu0 0.0
    %688 = vmatprep.subr.mxu0 0.0
    %689 = vmatpush1.msra.mxu0 0.0
    %690 = vmatprep.subr.mxu0 0.0
    %691 = vmatpush1.msra.mxu0 0.0
    %692 = vmatprep.subr.mxu0 0.0
    %693 = vmatpush1.msra.mxu0 0.0
    %694 = vmatprep.subr.mxu0 0.0
    %695 = vmatpush1.msra.mxu0 0.0
    %696 = vmatprep.subr.mxu0 0.0
    %697 = vmatpush1.msra.mxu0 0.0
    %698 = vmatprep.subr.mxu0 0.0
    %699 = vmatpush1.msra.mxu0 0.0
    %700 = vmatprep.subr.mxu0 0.0
    %701 = vmatpush1.msra.mxu0 0.0
    %702 = vmatprep.mubr.f32.mxu0 0.0
    %703 = vmatmul.mubr.f32.gmra.mrb[0].mxu0 %v614
    %v704 = vpop.f32.mrb[0].mxu0
    %v705 = vadd.f32 %v636, %v704
    %v706 = vpop.f32.mrb[0].mxu0
    %707 = vdwg.mxu0
    %708 = vst [vmem:[#allocation17] sm:$0xff] %v705
    %v709 = vlaneseq
    %v710 = vand.u32 %v709, 127
    %vm711 = vcmp.lt.s32.totalorder %v710, 5
    %v712 = vsel %vm711, %v705, -inf
    %713 = vmax.xlane.f32.xlu0 %v712
    %v714 = vpop.xlane.xlu0 %713
    %v715 = vsub.f32 %v712, %v714
    %v716 = vmul.f32 %v715, 1.442695
    %v717 = vpow.pop %v716
    %718 = vadd.xlane.f32.xlu0 %v717
    %v719 = vpop.xlane.xlu0 %718
    %v720 = vrcp.pop %v719
    %v721 = vmul.f32 %v717, %v720
    %722 = vst [vmem:[#allocation18] sm:$0xff] %v721
    // Predicated region
    $region82: #{tpu_custom_call.1} parent=1 // pred_check
      _
    $region83: #{tpu_custom_call.1} parent=1 // pred_check_branch
      %724 = sbr.rel (0) target = $region85
    $region84: #{tpu_custom_call.1} parent=1 // pred_region
      %s726 = ssub.s32 128, 128
      %727 = vsyncadd [#allocation4], %s726
      %s729 = sshll.u32 [#allocation14], 4
      %s730 = int_to_ptr.vmem [resolvable:$true] %s729
      %732 = dma.vmem_to_hbm [thread:$0]  %s730, 128, %s13, [#allocation4]
    $region85: #{tpu_custom_call.1} parent=1 // pred_fallthru
      _
    // Predicated region
    $region86: #{tpu_custom_call.1} parent=1 // pred_check
      _
    $region87: #{tpu_custom_call.1} parent=1 // pred_check_branch
      %734 = sbr.rel (0) target = $region89
    $region88: #{tpu_custom_call.1} parent=1 // pred_region
      %s736 = ssub.s32 128, 128
      %737 = vsyncadd [#allocation16], %s736
      %s739 = sshll.u32 [#allocation15], 4
      %s740 = int_to_ptr.vmem [resolvable:$true] %s739
      %742 = dma.vmem_to_hbm [thread:$0]  %s740, 128, %s14, [#allocation16]
    $region89: #{tpu_custom_call.1} parent=1 // pred_fallthru
      _
    // Predicated region
    $region90: #{tpu_custom_call.1} parent=1 // pred_check
      _
    $region91: #{tpu_custom_call.1} parent=1 // pred_check_branch
      %744 = sbr.rel (0) target = $region93
    $region92: #{tpu_custom_call.1} parent=1 // pred_region
      %s746 = ssub.s32 128, 128
      %747 = vsyncadd [#allocation16], %s746
      %s749 = sshll.u32 [#allocation17], 4
      %s750 = int_to_ptr.vmem [resolvable:$true] %s749
      %752 = dma.vmem_to_hbm [thread:$0]  %s750, 128, %s15, [#allocation16]
    $region93: #{tpu_custom_call.1} parent=1 // pred_fallthru
      _
    // Predicated region
    $region94: #{tpu_custom_call.1} parent=1 // pred_check
      _
    $region95: #{tpu_custom_call.1} parent=1 // pred_check_branch
      %754 = sbr.rel (0) target = $region97
    $region96: #{tpu_custom_call.1} parent=1 // pred_region
      %s756 = ssub.s32 128, 128
      %757 = vsyncadd [#allocation19], %s756
      %s759 = sshll.u32 [#allocation18], 4
      %s760 = int_to_ptr.vmem [resolvable:$true] %s759
      %762 = dma.vmem_to_hbm [thread:$0]  %s760, 128, %s16, [#allocation19]
    $region97: #{tpu_custom_call.1} parent=1 // pred_fallthru
      _
    // Predicated region
    $region98: #{tpu_custom_call.1} parent=1 // pred_check
      _
    $region99: #{tpu_custom_call.1} parent=1 // pred_check_branch
      %764 = sbr.rel (0) target = $region101
    $region100: #{tpu_custom_call.1} parent=1 // pred_region
      %765 = dma.done [#allocation4], 128
    $region101: #{tpu_custom_call.1} parent=1 // pred_fallthru
      _
    // Predicated region
    $region102: #{tpu_custom_call.1} parent=1 // pred_check
      _
    $region103: #{tpu_custom_call.1} parent=1 // pred_check_branch
      %767 = sbr.rel (0) target = $region105
    $region104: #{tpu_custom_call.1} parent=1 // pred_region
      %768 = dma.done [#allocation16], 128
    $region105: #{tpu_custom_call.1} parent=1 // pred_fallthru
      _
    // Predicated region
    $region106: #{tpu_custom_call.1} parent=1 // pred_check
      _
    $region107: #{tpu_custom_call.1} parent=1 // pred_check_branch
      %770 = sbr.rel (0) target = $region109
    $region108: #{tpu_custom_call.1} parent=1 // pred_region
      %771 = dma.done [#allocation16], 128
    $region109: #{tpu_custom_call.1} parent=1 // pred_fallthru
      _
    // Predicated region
    $region110: #{tpu_custom_call.1} parent=1 // pred_check
      _
    $region111: #{tpu_custom_call.1} parent=1 // pred_check_branch
      %773 = sbr.rel (0) target = $region113
    $region112: #{tpu_custom_call.1} parent=1 // pred_region
      %774 = dma.done [#allocation19], 128
    $region113: #{tpu_custom_call.1} parent=1 // pred_fallthru
      _
    %775 = vsyncpa [#allocation3], 1
    %776 = vsyncpa [#allocation6], 1
    %777 = vsyncpa [#allocation9], 1
    %778 = vsyncpa [#allocation12], 1
    %779 = vsyncpa [#allocation4], 1
    %780 = vsyncpa [#allocation16], 1
    %781 = vsyncpa [#allocation19], 1

</llo_original>
